<compile_context>
chip_gen: v7x
topology: tpu7x:2x2x1
jax: 0.10.0
libtpu: 0.0.40
codegen_flags: <defaults>
</compile_context>

<pallas_src>
import functools

import jax
import jax.numpy as jnp
from jax.experimental import pallas as pl
from jax.experimental.pallas import tpu as pltpu

# Network dims (fixed by the PyTorch module defaults).
IN_F = 3           # input_size
H1_F = 64          # hidden_size[0]
H2_F = 32          # hidden_size[1]
OUT_F = 5          # num_actions
OUT_PAD = 8        # 5 padded to 8: narrow lane-padded output slab
LANES = 128        # TPU lane width

# Small f32 slab (8, 128): fc1 weights + all biases (VPU-side parameters).
W1_ROW = 0         # rows 0..2 : w1 (3, 64), lane-padded with zeros
B1_ROW = 3         # row  3    : b1 (64,)
B2_ROW = 4         # row  4    : b2 (32,)
B3_ROW = 5         # row  5    : b3 (5,)
P1_ROWS = 8

# bf16 MXU slab (256, 128): fc2/fc3 weight matrices, zero-padded to 128x128.
W2_ROW = 0         # rows   0..127 : w2 (64, 32) zero-padded
W3_ROW = LANES     # rows 128..255 : w3 (32, 5)  zero-padded
P2_ROWS = 2 * LANES


def brain_kernel(x_ref, p1_ref, p2_ref, o_ref, *, mxu_dtype):
    x = x_ref[...]                                                  # (TB, 3) f32

    # fc1 (K=3): three f32 VPU broadcast FMAs -- no MXU round trip, no bf16
    # elementwise math (v5e-safe).
    # TODO(synk): if a bundle profile shows the x-column lane-broadcasts
    # saturating the XLU at large TB, switch fc1 to a K=8 MXU matmul
    # (pad x to 8 columns in the wrapper and store w1 as an (8, 128) block).
    h1 = (x[:, 0:1] * p1_ref[W1_ROW + 0:W1_ROW + 1, :]
          + x[:, 1:2] * p1_ref[W1_ROW + 1:W1_ROW + 2, :]
          + x[:, 2:3] * p1_ref[W1_ROW + 2:W1_ROW + 3, :])           # (TB, 128)
    h1 = jnp.maximum(h1 + p1_ref[B1_ROW:B1_ROW + 1, :], 0.0)        # cols >=64 stay 0

    # fc2: single-pass MXU (bf16 operands, f32 accumulation); zero padding
    # keeps cols >=32 exactly 0.
    h2 = jnp.dot(h1.astype(mxu_dtype), p2_ref[W2_ROW:W2_ROW + LANES, :],
                 preferred_element_type=jnp.float32)
    h2 = jnp.maximum(h2 + p1_ref[B2_ROW:B2_ROW + 1, :], 0.0)        # (TB, 128)

    # fc3: same, then narrow to the 8-lane output slab (only 5 lanes are real,
    # padded lanes are exactly 0).
    out = jnp.dot(h2.astype(mxu_dtype), p2_ref[W3_ROW:W3_ROW + LANES, :],
                  preferred_element_type=jnp.float32)               # (TB, 128)
    out = out + p1_ref[B3_ROW:B3_ROW + 1, :]
    o_ref[...] = out[:, :OUT_PAD].astype(o_ref.dtype)               # (TB, 8) writeback


def _round_up(n, m):
    return ((n + m - 1) // m) * m


def _ceil_div(n, m):
    return -(-n // m)


def pack_params(params, mxu_dtype=jnp.bfloat16):
    """Pack (w1,b1,w2,b2,w3,b3) into one f32 slab (fc1+biases) and one MXU slab."""
    w1, b1, w2, b2, w3, b3 = params

    p1 = jnp.zeros((P1_ROWS, LANES), jnp.float32)
    p1 = p1.at[W1_ROW:W1_ROW + IN_F, :H1_F].set(w1.astype(jnp.float32))
    p1 = p1.at[B1_ROW, :H1_F].set(b1.reshape(-1).astype(jnp.float32))
    p1 = p1.at[B2_ROW, :H2_F].set(b2.reshape(-1).astype(jnp.float32))
    p1 = p1.at[B3_ROW, :OUT_F].set(b3.reshape(-1).astype(jnp.float32))

    p2 = jnp.zeros((P2_ROWS, LANES), mxu_dtype)
    p2 = p2.at[W2_ROW:W2_ROW + H1_F, :H2_F].set(w2.astype(mxu_dtype))
    p2 = p2.at[W3_ROW:W3_ROW + H2_F, :OUT_F].set(w3.astype(mxu_dtype))
    return p1, p2


def brain_forward(x, params, *, tile_b=1024, mxu_dtype=jnp.bfloat16):
    """Forward pass.  Pass mxu_dtype=jnp.float32 for bit-faithful f32 matmuls."""
    B = x.shape[0]
    p1, p2 = pack_params(params, mxu_dtype)

    # Tile choice: large tiles (default ~1024 rows) amortize the ~0.35us
    # per-grid-step overhead; choosing the grid count first bounds padding
    # waste to < 8 * n_steps rows (instead of up to a full tile).
    B8 = _round_up(B, 8)
    n_steps = max(1, _ceil_div(B8, tile_b))
    TB = _round_up(_ceil_div(B8, n_steps), 8)
    B_pad = n_steps * TB
    if B_pad != B:
        x = jnp.pad(x, ((0, B_pad - B), (0, 0)))

    flops = 2 * B_pad * (IN_F * H1_F + H1_F * H2_F + H2_F * OUT_F)
    bytes_accessed = (B_pad * IN_F * 4
                      + p1.size * p1.dtype.itemsize
                      + p2.size * p2.dtype.itemsize
                      + B_pad * OUT_PAD * 4)

    kernel = functools.partial(brain_kernel, mxu_dtype=mxu_dtype)
    out = pl.pallas_call(
        kernel,
        out_shape=jax.ShapeDtypeStruct((B_pad, OUT_PAD), jnp.float32),
        grid=(n_steps,),
        in_specs=[
            pl.BlockSpec((TB, IN_F), lambda i: (i, 0)),        # batch-tiled input
            pl.BlockSpec((P1_ROWS, LANES), lambda i: (0, 0)),  # fc1 + biases (f32), VMEM-resident
            pl.BlockSpec((P2_ROWS, LANES), lambda i: (0, 0)),  # fc2/fc3 MXU weights, VMEM-resident
        ],
        out_specs=pl.BlockSpec((TB, OUT_PAD), lambda i: (i, 0)),  # narrow 8-lane output
        compiler_params=pltpu.CompilerParams(
            # Batch axis is independent -> megacore sharding on multi-TC chips.
            dimension_semantics=("parallel",)),
        cost_estimate=pl.CostEstimate(
            flops=flops, transcendentals=0, bytes_accessed=bytes_accessed),
    )(x, p1, p2)
    return out[:B, :OUT_F]


def init_params(key, input_size=IN_F, hidden_size=(H1_F, H2_F), num_actions=OUT_F):
    """Deterministic init mimicking PyTorch nn.Linear (uniform +/- 1/sqrt(fan_in))."""
    dims = [input_size, hidden_size[0], hidden_size[1], num_actions]
    params = []
    for i in range(3):
        fan_in, fan_out = dims[i], dims[i + 1]
        key, kw, kb = jax.random.split(key, 3)
        bound = 1.0 / jnp.sqrt(fan_in)
        w = jax.random.uniform(kw, (fan_in, fan_out), jnp.float32, -bound, bound)
        b = jax.random.uniform(kb, (fan_out,), jnp.float32, -bound, bound)
        params.extend([w, b])
    return tuple(params)


def reference_forward(x, params):
    w1, b1, w2, b2, w3, b3 = params
    h1 = jnp.maximum(x @ w1 + b1, 0.0)
    h2 = jnp.maximum(h1 @ w2 + b2, 0.0)
    return h2 @ w3 + b3


if __name__ == "__main__":
    key = jax.random.PRNGKey(0)
    key, kx = jax.random.split(key)

    B = 8
    x = jax.random.normal(kx, (B, IN_F), dtype=jnp.float32)
    params = init_params(key)

    out = brain_forward(x, params)
    out = jax.block_until_ready(out)

    ref = reference_forward(x, params)
    assert out.shape == (B, OUT_F)
    # bf16 MXU operands with f32 accumulation: loose-but-meaningful tolerance
    # vs. the pure-f32 reference (observed error ~1e-3 for this 3-64-32-5 MLP).
    assert jnp.allclose(out, ref, atol=5e-2, rtol=5e-2), "mismatch vs reference"

    print("KERNEL_OK")
</pallas_src>

<mosaic_0001>
module attributes {stable_mosaic.version = 11 : i64} {
  func.func @brain_kernel(%arg0: i32, %arg1: memref<8x3xf32, #tpu.memory_space<vmem>>, %arg2: memref<8x128xf32, #tpu.memory_space<vmem>>, %arg3: memref<256x128xbf16, #tpu.memory_space<vmem>>, %arg4: memref<8x8xf32, #tpu.memory_space<vmem>>) attributes {dimension_semantics = [#tpu.dimension_semantics<parallel>], iteration_bounds = array<i64: 1>, scalar_prefetch = 0 : i64, scratch_operands = 0 : i64, tpu.core_type = #tpu.core_type<tc>, window_params = [{transform_indices = @transform_0, window_bounds = array<i64: 8, 3>}, {pipeline_mode = #tpu.pipeline_mode<synchronous>, transform_indices = @transform_1, window_bounds = array<i64: 8, 128>}, {pipeline_mode = #tpu.pipeline_mode<synchronous>, transform_indices = @transform_2, window_bounds = array<i64: 256, 128>}, {transform_indices = @transform_3, window_bounds = array<i64: 8, 8>}]} {
    %c0 = arith.constant 0 : index
    %c0_0 = arith.constant 0 : index
    %0 = vector.load %arg1[%c0, %c0_0] : memref<8x3xf32, #tpu.memory_space<vmem>>, vector<8x3xf32>
    %1 = vector.extract_strided_slice %0 {offsets = [0, 0], sizes = [8, 1], strides = [1, 1]} : vector<8x3xf32> to vector<8x1xf32>
    %c0_1 = arith.constant 0 : index
    %c0_2 = arith.constant 0 : index
    %2 = vector.load %arg2[%c0_1, %c0_2] : memref<8x128xf32, #tpu.memory_space<vmem>>, vector<1x128xf32>
    %3 = vector.broadcast %1 : vector<8x1xf32> to vector<8x128xf32>
    %4 = vector.broadcast %2 : vector<1x128xf32> to vector<8x128xf32>
    %5 = arith.mulf %3, %4 : vector<8x128xf32>
    %6 = vector.extract_strided_slice %0 {offsets = [0, 1], sizes = [8, 1], strides = [1, 1]} : vector<8x3xf32> to vector<8x1xf32>
    %c1 = arith.constant 1 : index
    %c0_3 = arith.constant 0 : index
    %7 = vector.load %arg2[%c1, %c0_3] : memref<8x128xf32, #tpu.memory_space<vmem>>, vector<1x128xf32>
    %8 = vector.broadcast %6 : vector<8x1xf32> to vector<8x128xf32>
    %9 = vector.broadcast %7 : vector<1x128xf32> to vector<8x128xf32>
    %10 = arith.mulf %8, %9 : vector<8x128xf32>
    %11 = arith.addf %5, %10 : vector<8x128xf32>
    %12 = vector.extract_strided_slice %0 {offsets = [0, 2], sizes = [8, 1], strides = [1, 1]} : vector<8x3xf32> to vector<8x1xf32>
    %c2 = arith.constant 2 : index
    %c0_4 = arith.constant 0 : index
    %13 = vector.load %arg2[%c2, %c0_4] : memref<8x128xf32, #tpu.memory_space<vmem>>, vector<1x128xf32>
    %14 = vector.broadcast %12 : vector<8x1xf32> to vector<8x128xf32>
    %15 = vector.broadcast %13 : vector<1x128xf32> to vector<8x128xf32>
    %16 = arith.mulf %14, %15 : vector<8x128xf32>
    %17 = arith.addf %11, %16 : vector<8x128xf32>
    %c3 = arith.constant 3 : index
    %c0_5 = arith.constant 0 : index
    %18 = vector.load %arg2[%c3, %c0_5] : memref<8x128xf32, #tpu.memory_space<vmem>>, vector<1x128xf32>
    %19 = vector.broadcast %18 : vector<1x128xf32> to vector<8x128xf32>
    %20 = arith.addf %17, %19 : vector<8x128xf32>
    %cst = arith.constant 0.000000e+00 : f32
    %21 = vector.broadcast %cst : f32 to vector<8x128xf32>
    %22 = arith.maximumf %20, %21 : vector<8x128xf32>
    %23 = arith.truncf %22 : vector<8x128xf32> to vector<8x128xbf16>
    %c0_6 = arith.constant 0 : index
    %c0_7 = arith.constant 0 : index
    %24 = vector.load %arg3[%c0_6, %c0_7] : memref<256x128xbf16, #tpu.memory_space<vmem>>, vector<128x128xbf16>
    %cst_8 = arith.constant dense<0.000000e+00> : vector<8x128xf32>
    %25 = tpu.matmul %23, %24, %cst_8 {dimension_numbers = #tpu.dot_dimension_numbers<[1], [0], [0], [1], [0, 0, 1, 1], [], []>} : vector<8x128xbf16>, vector<128x128xbf16>, vector<8x128xf32> -> vector<8x128xf32>
    %c4 = arith.constant 4 : index
    %c0_9 = arith.constant 0 : index
    %26 = vector.load %arg2[%c4, %c0_9] : memref<8x128xf32, #tpu.memory_space<vmem>>, vector<1x128xf32>
    %27 = vector.broadcast %26 : vector<1x128xf32> to vector<8x128xf32>
    %28 = arith.addf %25, %27 : vector<8x128xf32>
    %cst_10 = arith.constant 0.000000e+00 : f32
    %29 = vector.broadcast %cst_10 : f32 to vector<8x128xf32>
    %30 = arith.maximumf %28, %29 : vector<8x128xf32>
    %31 = arith.truncf %30 : vector<8x128xf32> to vector<8x128xbf16>
    %c128 = arith.constant 128 : index
    %c0_11 = arith.constant 0 : index
    %32 = vector.load %arg3[%c128, %c0_11] : memref<256x128xbf16, #tpu.memory_space<vmem>>, vector<128x128xbf16>
    %cst_12 = arith.constant dense<0.000000e+00> : vector<8x128xf32>
    %33 = tpu.matmul %31, %32, %cst_12 {dimension_numbers = #tpu.dot_dimension_numbers<[1], [0], [0], [1], [0, 0, 1, 1], [], []>} : vector<8x128xbf16>, vector<128x128xbf16>, vector<8x128xf32> -> vector<8x128xf32>
    %c5 = arith.constant 5 : index
    %c0_13 = arith.constant 0 : index
    %34 = vector.load %arg2[%c5, %c0_13] : memref<8x128xf32, #tpu.memory_space<vmem>>, vector<1x128xf32>
    %35 = vector.broadcast %34 : vector<1x128xf32> to vector<8x128xf32>
    %36 = arith.addf %33, %35 : vector<8x128xf32>
    %37 = vector.extract_strided_slice %36 {offsets = [0, 0], sizes = [8, 8], strides = [1, 1]} : vector<8x128xf32> to vector<8x8xf32>
    %c0_14 = arith.constant 0 : index
    %c0_15 = arith.constant 0 : index
    %38 = vector.load %arg4[%c0_14, %c0_15] : memref<8x8xf32, #tpu.memory_space<vmem>>, vector<8x8xf32>
    tpu.vector_store %arg4[%c0_14, %c0_15], %37 {strides = array<i32>} : memref<8x8xf32, #tpu.memory_space<vmem>>, vector<8x8xf32>,
    return
  }
  func.func @transform_0(%arg0: i32) -> (i32, i32) {
    %c0_i32 = arith.constant 0 : i32
    %c0_i32_0 = arith.constant 0 : i32
    return %arg0, %c0_i32 : i32, i32
  }
  func.func @transform_1(%arg0: i32) -> (i32, i32) {
    %c0_i32 = arith.constant 0 : i32
    %c0_i32_0 = arith.constant 0 : i32
    %c0_i32_1 = arith.constant 0 : i32
    return %c0_i32, %c0_i32_0 : i32, i32
  }
  func.func @transform_2(%arg0: i32) -> (i32, i32) {
    %c0_i32 = arith.constant 0 : i32
    %c0_i32_0 = arith.constant 0 : i32
    %c0_i32_1 = arith.constant 0 : i32
    return %c0_i32, %c0_i32_0 : i32, i32
  }
  func.func @transform_3(%arg0: i32) -> (i32, i32) {
    %c0_i32 = arith.constant 0 : i32
    %c0_i32_0 = arith.constant 0 : i32
    return %arg0, %c0_i32 : i32, i32
  }
}

</mosaic_0001>

<llo_original>
// kernel: tpu_custom_call.1
$region0: #{tpu_custom_call.1}
  #allocation0 [shape = 'u32[]', space=smem, size = 0x4, offset = 0x4, fixed_abs, tag = 'smem constant byte address 0x4 - core index']
  #allocation1 [shape = 'u32[144,128]{1,0:T(1,128)}', space=vmem, size = 0x12000, scoped, tag = 'internal scratch']
  %s0 = inlined_call_operand.vmem [shape: f32[8,3], index: 0, kind: input, shape index: {}]
  %s1 = inlined_call_operand.vmem [shape: f32[8,128], index: 1, kind: input, shape index: {}]
  %s2 = inlined_call_operand.hbm [shape: bf16[256,128], index: 2, kind: input, shape index: {}]
  %s3 = inlined_call_operand.hbm [shape: f32[8,8], index: 3, kind: output, shape index: {}]
  %s4 = sld [smem:[#allocation0]]
  $region26: #{tpu_custom_call.1} parent=0
    _
  %s6 = ssub.s32 1, %s4
  %s7 = scalar_select 0, %s6, %s4
  $region1: #{tpu_custom_call.1} parent=0
    #allocation2 [shape = 'u8[65536]{0}', space=vmem, size = 0x10000, scoped, tag = 'input window, operand 2, single buffered']
    #allocation3 [shape = 's32[1]{0}', space=sflag, size = 0x4, scoped, tag = 'scoped memory for tpu_custom_call.1']
    #allocation4 [shape = 's32[1]{0}', space=sflag, size = 0x4, scoped, tag = 'scoped memory for tpu_custom_call.1']
    #allocation5 [shape = 'u8[4096]{0}', space=vmem, size = 0x1000, scoped, tag = 'output window, operand 0, single buffered']
    %8 = vsyncpa [#allocation3], 0
    %9 = vsyncpa [#allocation4], 0
    // Predicated region
    $region2: #{tpu_custom_call.1} parent=1 // pred_check
      _
    $region3: #{tpu_custom_call.1} parent=1 // pred_check_branch
      %11 = sbr.rel (0) target = $region5
    $region4: #{tpu_custom_call.1} parent=1 // pred_region
      _
    $region5: #{tpu_custom_call.1} parent=1 // pred_fallthru
      _
    // Predicated region
    $region6: #{tpu_custom_call.1} parent=1 // pred_check
      _
    $region7: #{tpu_custom_call.1} parent=1 // pred_check_branch
      %13 = sbr.rel (0) target = $region9
    $region8: #{tpu_custom_call.1} parent=1 // pred_region
      _
    $region9: #{tpu_custom_call.1} parent=1 // pred_fallthru
      _
    // Predicated region
    $region10: #{tpu_custom_call.1} parent=1 // pred_check
      _
    $region11: #{tpu_custom_call.1} parent=1 // pred_check_branch
      %15 = sbr.rel (0) target = $region13
    $region12: #{tpu_custom_call.1} parent=1 // pred_region
      %s17 = ssub.s32 2048, 2048
      %18 = vsyncadd [#allocation3], %s17
      %s19 = sshll.u32 [#allocation2], 4
      %s20 = int_to_ptr.vmem [resolvable:$true] %s19
      %25 = dma.hbm_to_vmem [thread:$0]  %s2, 2048, %s20, [#allocation3], 64, 64, 4
    $region13: #{tpu_custom_call.1} parent=1 // pred_fallthru
      _
    // Predicated region
    $region14: #{tpu_custom_call.1} parent=1 // pred_check
      _
    $region15: #{tpu_custom_call.1} parent=1 // pred_check_branch
      %27 = sbr.rel (0) target = $region17
    $region16: #{tpu_custom_call.1} parent=1 // pred_region
      %28 = dma.done [#allocation3], 2048
    $region17: #{tpu_custom_call.1} parent=1 // pred_fallthru
      _
    %v30 = vld [vmem:[%s0] sm:$0xff]
    %v31 = vld [vmem:[%s1] sm:$0x1]
    %33 = vset.pattern.permute.xlu0 0
    %34 = vperm.xlu0 %33, %v30
    %v35 = vpop.permute.xlu0 %34
    %v37 = vlaneseq
    %v38 = vshrl.u32 %v37, 7
    %v39 = vsub.s32 0, %v38
    %v40 = vrot.slane %v31, %v39
    %v41 = vmul.f32 %v35, %v40
    %v42 = vld [vmem:[%s1 + $0x1] sm:$0x1]
    %43 = vset.pattern.permute.xlu0 1
    %44 = vperm.xlu0 %43, %v30
    %v45 = vpop.permute.xlu0 %44
    %v47 = vlaneseq
    %v48 = vshrl.u32 %v47, 7
    %v49 = vsub.s32 0, %v48
    %v50 = vrot.slane %v42, %v49
    %v51 = vmul.f32 %v45, %v50
    %v52 = vadd.f32 %v41, %v51
    %v53 = vld [vmem:[%s1 + $0x2] sm:$0x1]
    %54 = vset.pattern.permute.xlu0 2
    %55 = vperm.xlu0 %54, %v30
    %v56 = vpop.permute.xlu0 %55
    %v58 = vlaneseq
    %v59 = vshrl.u32 %v58, 7
    %v60 = vsub.s32 0, %v59
    %v61 = vrot.slane %v53, %v60
    %v62 = vmul.f32 %v56, %v61
    %v63 = vadd.f32 %v52, %v62
    %v64 = vld [vmem:[%s1 + $0x3] sm:$0x1]
    %v65 = vlaneseq
    %v66 = vshrl.u32 %v65, 7
    %v67 = vsub.s32 0, %v66
    %v68 = vrot.slane %v64, %v67
    %v69 = vadd.f32 %v63, %v68
    %v70 = vmax.f32 %v69, 0.0
    %v71 = vpack.c.bf16 %v70, %v70
    %v72 = vld [vmem:[#allocation2] sm:$0xf]
    %v73 = vld [vmem:[#allocation2 + $0x4] sm:$0xf]
    %v74 = vld [vmem:[#allocation2 + $0x8] sm:$0xf]
    %v75 = vld [vmem:[#allocation2 + $0xc] sm:$0xf]
    %v76 = vld [vmem:[#allocation2 + $0x10] sm:$0xf]
    %v77 = vld [vmem:[#allocation2 + $0x14] sm:$0xf]
    %v78 = vld [vmem:[#allocation2 + $0x18] sm:$0xf]
    %v79 = vld [vmem:[#allocation2 + $0x1c] sm:$0xf]
    %v80 = vld [vmem:[#allocation2 + $0x20] sm:$0xf]
    %v81 = vld [vmem:[#allocation2 + $0x24] sm:$0xf]
    %v82 = vld [vmem:[#allocation2 + $0x28] sm:$0xf]
    %v83 = vld [vmem:[#allocation2 + $0x2c] sm:$0xf]
    %v84 = vld [vmem:[#allocation2 + $0x30] sm:$0xf]
    %v85 = vld [vmem:[#allocation2 + $0x34] sm:$0xf]
    %v86 = vld [vmem:[#allocation2 + $0x38] sm:$0xf]
    %v87 = vld [vmem:[#allocation2 + $0x3c] sm:$0xf]
    %v88 = vld [vmem:[%s1 + $0x4] sm:$0x1]
    %v89 = vlaneseq
    %v90 = vshrl.u32 %v89, 7
    %v91 = vsub.s32 0, %v90
    %v92 = vrot.slane %v88, %v91
    %v109 = vunpack.c.l.b16 %v72
    %v110 = vunpack.c.l.b16 %v73
    %v111 = vunpack.c.l.b16 %v74
    %v112 = vunpack.c.l.b16 %v75
    %v113 = vunpack.c.l.b16 %v76
    %v114 = vunpack.c.l.b16 %v77
    %v115 = vunpack.c.l.b16 %v78
    %v116 = vunpack.c.l.b16 %v79
    %v117 = vunpack.c.l.b16 %v80
    %v118 = vunpack.c.l.b16 %v81
    %v119 = vunpack.c.l.b16 %v82
    %v120 = vunpack.c.l.b16 %v83
    %v121 = vunpack.c.l.b16 %v84
    %v122 = vunpack.c.l.b16 %v85
    %v123 = vunpack.c.l.b16 %v86
    %v124 = vunpack.c.l.b16 %v87
    %v125 = vpack.c.b16 %v110, %v109
    %v126 = vpack.c.b16 %v112, %v111
    %v127 = vpack.c.b16 %v114, %v113
    %v128 = vpack.c.b16 %v116, %v115
    %v129 = vpack.c.b16 %v118, %v117
    %v130 = vpack.c.b16 %v120, %v119
    %v131 = vpack.c.b16 %v122, %v121
    %v132 = vpack.c.b16 %v124, %v123
    %141 = vmatprep.subr.bf16.mxu0 0
    %142 = vmatpush1.bf16.msra.mxu0 %v125
    %143 = vmatprep.subr.bf16.mxu0 0
    %144 = vmatpush1.bf16.msra.mxu0 %v126
    %145 = vmatprep.subr.bf16.mxu0 0
    %146 = vmatpush1.bf16.msra.mxu0 %v127
    %147 = vmatprep.subr.bf16.mxu0 0
    %148 = vmatpush1.bf16.msra.mxu0 %v128
    %149 = vmatprep.subr.bf16.mxu0 0
    %150 = vmatpush1.bf16.msra.mxu0 %v129
    %151 = vmatprep.subr.bf16.mxu0 0
    %152 = vmatpush1.bf16.msra.mxu0 %v130
    %153 = vmatprep.subr.bf16.mxu0 0
    %154 = vmatpush1.bf16.msra.mxu0 %v131
    %155 = vmatprep.subr.bf16.mxu0 0
    %156 = vmatpush1.bf16.msra.mxu0 %v132
    %157 = vmatprep.subr.bf16.mxu0 0
    %158 = vmatpush1.bf16.msra.mxu0 0
    %159 = vmatprep.subr.bf16.mxu0 0
    %160 = vmatpush1.bf16.msra.mxu0 0
    %161 = vmatprep.subr.bf16.mxu0 0
    %162 = vmatpush1.bf16.msra.mxu0 0
    %163 = vmatprep.subr.bf16.mxu0 0
    %164 = vmatpush1.bf16.msra.mxu0 0
    %165 = vmatprep.subr.bf16.mxu0 0
    %166 = vmatpush1.bf16.msra.mxu0 0
    %167 = vmatprep.subr.bf16.mxu0 0
    %168 = vmatpush1.bf16.msra.mxu0 0
    %169 = vmatprep.subr.bf16.mxu0 0
    %170 = vmatpush1.bf16.msra.mxu0 0
    %171 = vmatprep.subr.bf16.mxu0 0
    %172 = vmatpush1.bf16.msra.mxu0 0
    %173 = vmatprep.mubr.bf16.mxu0 0
    %174 = vmatmul.mubr.bf16.gmra.mrb[0].mxu0 %v71
    %v175 = vpop.f32.mrb[0].mxu0
    %v176 = vadd.f32 %v92, %v175
    %v177 = vpop.f32.mrb[0].mxu0
    %v178 = vpop.f32.mrb[0].mxu0
    %v179 = vpop.f32.mrb[0].mxu0
    %180 = vdwg.mxu0
    %v181 = vmax.f32 %v176, 0.0
    %v182 = vpack.c.bf16 %v181, %v181
    %v183 = vld [vmem:[#allocation2 + $0x40] sm:$0xf]
    %v184 = vld [vmem:[#allocation2 + $0x44] sm:$0xf]
    %v185 = vld [vmem:[#allocation2 + $0x48] sm:$0xf]
    %v186 = vld [vmem:[#allocation2 + $0x4c] sm:$0xf]
    %v187 = vld [vmem:[#allocation2 + $0x50] sm:$0xf]
    %v188 = vld [vmem:[#allocation2 + $0x54] sm:$0xf]
    %v189 = vld [vmem:[#allocation2 + $0x58] sm:$0xf]
    %v190 = vld [vmem:[#allocation2 + $0x5c] sm:$0xf]
    %v191 = vld [vmem:[#allocation2 + $0x60] sm:$0xf]
    %v192 = vld [vmem:[#allocation2 + $0x64] sm:$0xf]
    %v193 = vld [vmem:[#allocation2 + $0x68] sm:$0xf]
    %v194 = vld [vmem:[#allocation2 + $0x6c] sm:$0xf]
    %v195 = vld [vmem:[#allocation2 + $0x70] sm:$0xf]
    %v196 = vld [vmem:[#allocation2 + $0x74] sm:$0xf]
    %v197 = vld [vmem:[#allocation2 + $0x78] sm:$0xf]
    %v198 = vld [vmem:[#allocation2 + $0x7c] sm:$0xf]
    %v199 = vld [vmem:[%s1 + $0x5] sm:$0x1]
    %v200 = vlaneseq
    %v201 = vshrl.u32 %v200, 7
    %v202 = vsub.s32 0, %v201
    %v203 = vrot.slane %v199, %v202
    %v220 = vunpack.c.l.b16 %v183
    %v221 = vunpack.c.l.b16 %v184
    %v222 = vunpack.c.l.b16 %v185
    %v223 = vunpack.c.l.b16 %v186
    %v224 = vunpack.c.l.b16 %v187
    %v225 = vunpack.c.l.b16 %v188
    %v226 = vunpack.c.l.b16 %v189
    %v227 = vunpack.c.l.b16 %v190
    %v228 = vunpack.c.l.b16 %v191
    %v229 = vunpack.c.l.b16 %v192
    %v230 = vunpack.c.l.b16 %v193
    %v231 = vunpack.c.l.b16 %v194
    %v232 = vunpack.c.l.b16 %v195
    %v233 = vunpack.c.l.b16 %v196
    %v234 = vunpack.c.l.b16 %v197
    %v235 = vunpack.c.l.b16 %v198
    %v236 = vpack.c.b16 %v221, %v220
    %v237 = vpack.c.b16 %v223, %v222
    %v238 = vpack.c.b16 %v225, %v224
    %v239 = vpack.c.b16 %v227, %v226
    %v240 = vpack.c.b16 %v229, %v228
    %v241 = vpack.c.b16 %v231, %v230
    %v242 = vpack.c.b16 %v233, %v232
    %v243 = vpack.c.b16 %v235, %v234
    %252 = vmatprep.subr.bf16.mxu0 0
    %253 = vmatpush1.bf16.msra.mxu0 %v236
    %254 = vmatprep.subr.bf16.mxu0 0
    %255 = vmatpush1.bf16.msra.mxu0 %v237
    %256 = vmatprep.subr.bf16.mxu0 0
    %257 = vmatpush1.bf16.msra.mxu0 %v238
    %258 = vmatprep.subr.bf16.mxu0 0
    %259 = vmatpush1.bf16.msra.mxu0 %v239
    %260 = vmatprep.subr.bf16.mxu0 0
    %261 = vmatpush1.bf16.msra.mxu0 %v240
    %262 = vmatprep.subr.bf16.mxu0 0
    %263 = vmatpush1.bf16.msra.mxu0 %v241
    %264 = vmatprep.subr.bf16.mxu0 0
    %265 = vmatpush1.bf16.msra.mxu0 %v242
    %266 = vmatprep.subr.bf16.mxu0 0
    %267 = vmatpush1.bf16.msra.mxu0 %v243
    %268 = vmatprep.subr.bf16.mxu0 0
    %269 = vmatpush1.bf16.msra.mxu0 0
    %270 = vmatprep.subr.bf16.mxu0 0
    %271 = vmatpush1.bf16.msra.mxu0 0
    %272 = vmatprep.subr.bf16.mxu0 0
    %273 = vmatpush1.bf16.msra.mxu0 0
    %274 = vmatprep.subr.bf16.mxu0 0
    %275 = vmatpush1.bf16.msra.mxu0 0
    %276 = vmatprep.subr.bf16.mxu0 0
    %277 = vmatpush1.bf16.msra.mxu0 0
    %278 = vmatprep.subr.bf16.mxu0 0
    %279 = vmatpush1.bf16.msra.mxu0 0
    %280 = vmatprep.subr.bf16.mxu0 0
    %281 = vmatpush1.bf16.msra.mxu0 0
    %282 = vmatprep.subr.bf16.mxu0 0
    %283 = vmatpush1.bf16.msra.mxu0 0
    %284 = vmatprep.mubr.bf16.mxu0 0
    %285 = vmatmul.mubr.bf16.gmra.mrb[0].mxu0 %v182
    %v286 = vpop.f32.mrb[0].mxu0
    %v287 = vadd.f32 %v203, %v286
    %v288 = vpop.f32.mrb[0].mxu0
    %v289 = vpop.f32.mrb[0].mxu0
    %v290 = vpop.f32.mrb[0].mxu0
    %291 = vdwg.mxu0
    %vm292 = vcmask 64512
    %293 = vst.msk [vmem:[#allocation5] sm:$0xff] %vm292, %v287
    // Predicated region
    $region18: #{tpu_custom_call.1} parent=1 // pred_check
      _
    $region19: #{tpu_custom_call.1} parent=1 // pred_check_branch
      %295 = sbr.rel (0) target = $region21
    $region20: #{tpu_custom_call.1} parent=1 // pred_region
      %s297 = ssub.s32 128, 128
      %298 = vsyncadd [#allocation4], %s297
      %s300 = sshll.u32 [#allocation5], 4
      %s301 = int_to_ptr.vmem [resolvable:$true] %s300
      %303 = dma.vmem_to_hbm [thread:$0]  %s301, 128, %s3, [#allocation4]
    $region21: #{tpu_custom_call.1} parent=1 // pred_fallthru
      _
    // Predicated region
    $region22: #{tpu_custom_call.1} parent=1 // pred_check
      _
    $region23: #{tpu_custom_call.1} parent=1 // pred_check_branch
      %305 = sbr.rel (0) target = $region25
    $region24: #{tpu_custom_call.1} parent=1 // pred_region
      %306 = dma.done [#allocation4], 128
    $region25: #{tpu_custom_call.1} parent=1 // pred_fallthru
      _
    %307 = vsyncpa [#allocation3], 1
    %308 = vsyncpa [#allocation4], 1

</llo_original>
